<compile_context>
chip_gen: v7x
topology: tpu7x:2x2x1
jax: 0.10.0
libtpu: 0.0.40
codegen_flags: <defaults>
</compile_context>

<pallas_src>
import functools

import numpy as np
import jax
import jax.numpy as jnp
from jax.experimental import pallas as pl
from jax.experimental.pallas import tpu as pltpu

NORM_EPS = 1e-6   # F.normalize eps
PD_EPS = 1e-6     # F.pairwise_distance eps


def _contrastive_kernel(erow_ref, ecol_ref, lrow_ref, lcol_ref, pos_ref,
                        sum_out_ref, cnt_out_ref, acc_sum, acc_cnt,
                        *, margin, n_real, d_real, tm, tn):
    i = pl.program_id(0)
    j = pl.program_id(1)

    @pl.when(j == 0)
    def _():
        acc_sum[...] = jnp.zeros_like(acc_sum)
        acc_cnt[...] = jnp.zeros_like(acc_cnt)

    # --- L2-normalize row / col tiles (F.normalize, p=2, dim=1, eps=1e-6) ---
    xr = erow_ref[...].astype(jnp.float32)                      # (TM, Dp)
    xc = ecol_ref[...].astype(jnp.float32)                      # (TN, Dp)
    nr = jnp.sqrt(jnp.sum(xr * xr, axis=1, keepdims=True))      # (TM, 1)
    nc = jnp.sqrt(jnp.sum(xc * xc, axis=1, keepdims=True))      # (TN, 1)
    er = xr / jnp.maximum(nr, NORM_EPS)
    ec = xc / jnp.maximum(nc, NORM_EPS)

    # --- pairwise squared distance with pairwise_distance eps, via expansion ---
    # d2[r,c] = sum_k (er[r,k] - ec[c,k] + eps)^2
    #         = (||er||^2 + 2*eps*sum(er) + D*eps^2)        row term  (TM,1)
    #         + (||ec||^2 - 2*eps*sum(ec))                  col term  (1,TN)
    #         - 2 <er, ec>
    # Gram matrix: bf16 operands, f32 accumulation, contract shared last dim (no .T).
    g = jax.lax.dot_general(er.astype(jnp.bfloat16), ec.astype(jnp.bfloat16),
                            (((1,), (1,)), ((), ())),
                            preferred_element_type=jnp.float32)  # (TM, TN)

    t_row = (jnp.sum(er * er + (2.0 * PD_EPS) * er, axis=1, keepdims=True)
             + float(d_real) * PD_EPS * PD_EPS)                  # (TM, 1)
    # Column-side term as a (1, TN) row via a tiny ones-matmul (avoids XLU relayout).
    ones_row = jnp.ones((1, ec.shape[1]), jnp.float32)
    t_col = jax.lax.dot_general(ones_row, ec * ec - (2.0 * PD_EPS) * ec,
                                (((1,), (1,)), ((), ())),
                                preferred_element_type=jnp.float32)  # (1, TN)

    d2 = jnp.maximum(t_row + t_col - 2.0 * g, 0.0)               # (TM, TN)
    dist = jnp.sqrt(d2)                                          # EUP-bound for small D
    hinge = jnp.maximum(margin - dist, 0.0)
    h2 = hinge * hinge

    # --- masks (padded rows/cols excluded via global indices) ---
    row_ids = i * tm + jax.lax.broadcasted_iota(jnp.int32, (tm, 1), 0)     # (TM,1)
    col_ids = j * tn + jax.lax.broadcasted_iota(jnp.int32, (tm, tn), 1)    # (TM,TN)
    valid_row = row_ids < n_real
    valid_col = col_ids < n_real

    lab_r = lrow_ref[...]                                        # (TM, 1) int32
    lab_c = lcol_ref[...]                                        # (1, TN) int32
    neg_mask = (lab_r != lab_c) & valid_row & valid_col          # (TM, TN) bool
    pos_mask = col_ids == pos_ref[...]                           # padded rows have -1

    # Positive (same-label, selected) and negative (all different-label) pairs are
    # disjoint, so one combined reduction suffices.
    contrib = jnp.where(pos_mask, d2, 0.0) + jnp.where(neg_mask, h2, 0.0)
    acc_sum[...] += jnp.sum(contrib)
    acc_cnt[...] += jnp.sum(neg_mask.astype(jnp.int32))          # exact int32 count

    @pl.when(j == pl.num_programs(1) - 1)
    def _():
        sum_out_ref[...] = jnp.broadcast_to(acc_sum[...], sum_out_ref.shape)
        cnt_out_ref[...] = jnp.broadcast_to(acc_cnt[...], cnt_out_ref.shape)


def contrastive_loss_v4(embeddings, labels, pos_idx, margin=1.0, tile=128):
    """embeddings: (N, D) float, labels: (N, 1) int, pos_idx: (N,) int32 -> scalar f32.

    tile=128 fits every generation (v5e/v6e/v7x) comfortably; raise to 256/512 on
    v5e/v6e if D is small, keep <=256 on v7x (64 MiB VMEM).
    """
    n, d = embeddings.shape

    # Pad D to a lane-dense multiple of 128 (zero padding is transparent to the math:
    # the eps term uses the *original* D explicitly).
    d_pad = max(128, ((d + 127) // 128) * 128)

    # Tile size / padded N.
    t = ((n + 7) // 8) * 8 if n <= tile else tile
    n_pad = ((n + t - 1) // t) * t
    num_i = n_pad // t
    num_j = n_pad // t

    emb_p = jnp.zeros((n_pad, d_pad), embeddings.dtype).at[:n, :d].set(embeddings)
    lab_flat = labels.reshape(-1).astype(jnp.int32)
    lab_row = jnp.full((n_pad, 1), -1, dtype=jnp.int32).at[:n, 0].set(lab_flat)
    lab_col = lab_row.reshape(1, n_pad)                      # host-side reshape, no in-kernel .T
    pos_col = jnp.full((n_pad, 1), -1, dtype=jnp.int32).at[:n, 0].set(
        pos_idx.reshape(-1).astype(jnp.int32))

    kernel = functools.partial(_contrastive_kernel, margin=float(margin),
                               n_real=int(n), d_real=int(d), tm=t, tn=t)

    cost = pl.CostEstimate(
        flops=int(2 * n_pad * n_pad * d_pad + 12 * n_pad * n_pad),
        transcendentals=int(n_pad * n_pad),
        bytes_accessed=int(4 * n_pad * d_pad * (num_i + num_j) + 4 * n_pad * 3),
    )

    out_sum, out_cnt = pl.pallas_call(
        kernel,
        out_shape=(jax.ShapeDtypeStruct((num_i, 1, 128), jnp.float32),
                   jax.ShapeDtypeStruct((num_i, 1, 128), jnp.int32)),
        grid_spec=pltpu.PrefetchScalarGridSpec(
            num_scalar_prefetch=0,
            grid=(num_i, num_j),
            in_specs=[
                pl.BlockSpec((t, d_pad), lambda i, j: (i, 0)),   # row embedding tile
                pl.BlockSpec((t, d_pad), lambda i, j: (j, 0)),   # col embedding tile
                pl.BlockSpec((t, 1),     lambda i, j: (i, 0)),   # row labels
                pl.BlockSpec((1, t),     lambda i, j: (0, j)),   # col labels (pre-transposed)
                pl.BlockSpec((t, 1),     lambda i, j: (i, 0)),   # positive indices
            ],
            out_specs=[
                pl.BlockSpec((1, 1, 128), lambda i, j: (i, 0, 0)),
                pl.BlockSpec((1, 1, 128), lambda i, j: (i, 0, 0)),
            ],
            scratch_shapes=[pltpu.VMEM((1, 1), jnp.float32),
                            pltpu.VMEM((1, 1), jnp.int32)],
        ),
        compiler_params=pltpu.CompilerParams(
            dimension_semantics=("parallel", "arbitrary"),
            vmem_limit_bytes=32 * 1024 * 1024),
        cost_estimate=cost,
    )(emb_p, emb_p, lab_row, lab_col, pos_col)

    total = jnp.sum(out_sum[:, 0, 0])
    neg_count = jnp.sum(out_cnt[:, 0, 0]).astype(jnp.float32)
    n_comparisons = jnp.float32(n) + neg_count   # one positive comparison per anchor
    return total / n_comparisons


def build_positive_indices(labels_np, seed=0):
    """Host-side deterministic replication of the module's np.random positive sampling."""
    rng = np.random.RandomState(seed)
    n = labels_np.shape[0]
    flat = labels_np.reshape(-1)
    idx = np.zeros((n,), dtype=np.int32)
    for anchor in range(n):
        while True:
            positive = rng.choice(range(n))
            if anchor != positive and flat[anchor] == flat[positive]:
                idx[anchor] = positive
                break
    return idx


if __name__ == "__main__":
    N, D = 8, 32
    key = jax.random.PRNGKey(0)

    embeddings = jax.random.normal(key, (N, D), dtype=jnp.float32)
    labels_np = np.array([0, 0, 1, 1, 0, 1, 0, 1], dtype=np.int32).reshape(N, 1)
    labels = jnp.asarray(labels_np)
    pos_idx = jnp.asarray(build_positive_indices(labels_np, seed=0))

    loss = contrastive_loss_v4(embeddings, labels, pos_idx, margin=1.0)
    loss = jax.block_until_ready(loss)
    assert bool(jnp.isfinite(loss))
    print("KERNEL_OK")
</pallas_src>

<mosaic_0001>
module attributes {stable_mosaic.version = 11 : i64} {
  func.func @_contrastive_kernel(%arg0: i32, %arg1: i32, %arg2: memref<8x128xf32, #tpu.memory_space<vmem>>, %arg3: memref<8x128xf32, #tpu.memory_space<vmem>>, %arg4: memref<8x1xi32, #tpu.memory_space<vmem>>, %arg5: memref<1x8xi32, #tpu.memory_space<vmem>>, %arg6: memref<8x1xi32, #tpu.memory_space<vmem>>, %arg7: memref<1x1x128xf32, #tpu.memory_space<vmem>>, %arg8: memref<1x1x128xi32, #tpu.memory_space<vmem>>, %arg9: memref<1x1xf32, #tpu.memory_space<vmem>>, %arg10: memref<1x1xi32, #tpu.memory_space<vmem>>) attributes {dimension_semantics = [#tpu.dimension_semantics<parallel>, #tpu.dimension_semantics<arbitrary>], iteration_bounds = array<i64: 1, 1>, scalar_prefetch = 0 : i64, scratch_operands = 2 : i64, tpu.core_type = #tpu.core_type<tc>, window_params = [{transform_indices = @transform_0, window_bounds = array<i64: 8, 128>}, {transform_indices = @transform_1, window_bounds = array<i64: 8, 128>}, {transform_indices = @transform_2, window_bounds = array<i64: 8, 1>}, {transform_indices = @transform_3, window_bounds = array<i64: 1, 8>}, {transform_indices = @transform_4, window_bounds = array<i64: 8, 1>}, {transform_indices = @transform_5, window_bounds = array<i64: 1, 1, 128>}, {transform_indices = @transform_6, window_bounds = array<i64: 1, 1, 128>}]} {
    %c0_i32 = arith.constant 0 : i32
    %0 = arith.cmpi eq, %arg1, %c0_i32 : i32
    %1 = arith.extui %0 : i1 to i32
    %c0_i32_0 = arith.constant 0 : i32
    %2 = arith.cmpi ne, %1, %c0_i32_0 : i32
    scf.if %2 {
      %cst_41 = arith.constant 0.000000e+00 : f32
      %100 = vector.broadcast %cst_41 : f32 to vector<1x1xf32>
      %c0_42 = arith.constant 0 : index
      %c0_43 = arith.constant 0 : index
      %101 = vector.load %arg9[%c0_42, %c0_43] : memref<1x1xf32, #tpu.memory_space<vmem>>, vector<1x1xf32>
      tpu.vector_store %arg9[%c0_42, %c0_43], %100 {strides = array<i32>} : memref<1x1xf32, #tpu.memory_space<vmem>>, vector<1x1xf32>,
      %c0_i32_44 = arith.constant 0 : i32
      %102 = vector.broadcast %c0_i32_44 : i32 to vector<1x1xi32>
      %c0_45 = arith.constant 0 : index
      %c0_46 = arith.constant 0 : index
      %103 = vector.load %arg10[%c0_45, %c0_46] : memref<1x1xi32, #tpu.memory_space<vmem>>, vector<1x1xi32>
      tpu.vector_store %arg10[%c0_45, %c0_46], %102 {strides = array<i32>} : memref<1x1xi32, #tpu.memory_space<vmem>>, vector<1x1xi32>,
    } else {
    }
    %c0 = arith.constant 0 : index
    %c0_1 = arith.constant 0 : index
    %3 = vector.load %arg2[%c0, %c0_1] : memref<8x128xf32, #tpu.memory_space<vmem>>, vector<8x128xf32>
    %c0_2 = arith.constant 0 : index
    %c0_3 = arith.constant 0 : index
    %4 = vector.load %arg3[%c0_2, %c0_3] : memref<8x128xf32, #tpu.memory_space<vmem>>, vector<8x128xf32>
    %5 = arith.mulf %3, %3 : vector<8x128xf32>
    %cst = arith.constant dense<0.000000e+00> : vector<8xf32>
    %6 = vector.multi_reduction <add>, %5, %cst [1] : vector<8x128xf32> to vector<8xf32>
    %7 = vector.shape_cast %6 : vector<8xf32> to vector<8x1xf32>
    %8 = math.sqrt %7 : vector<8x1xf32>
    %9 = arith.mulf %4, %4 : vector<8x128xf32>
    %cst_4 = arith.constant dense<0.000000e+00> : vector<8xf32>
    %10 = vector.multi_reduction <add>, %9, %cst_4 [1] : vector<8x128xf32> to vector<8xf32>
    %11 = vector.shape_cast %10 : vector<8xf32> to vector<8x1xf32>
    %12 = math.sqrt %11 : vector<8x1xf32>
    %cst_5 = arith.constant 9.99999997E-7 : f32
    %13 = vector.broadcast %cst_5 : f32 to vector<8x1xf32>
    %14 = arith.maximumf %8, %13 : vector<8x1xf32>
    %15 = vector.broadcast %14 : vector<8x1xf32> to vector<8x128xf32>
    %16 = arith.divf %3, %15 : vector<8x128xf32>
    %cst_6 = arith.constant 9.99999997E-7 : f32
    %17 = vector.broadcast %cst_6 : f32 to vector<8x1xf32>
    %18 = arith.maximumf %12, %17 : vector<8x1xf32>
    %19 = vector.broadcast %18 : vector<8x1xf32> to vector<8x128xf32>
    %20 = arith.divf %4, %19 : vector<8x128xf32>
    %21 = arith.truncf %16 : vector<8x128xf32> to vector<8x128xbf16>
    %22 = arith.truncf %20 : vector<8x128xf32> to vector<8x128xbf16>
    %cst_7 = arith.constant dense<0.000000e+00> : vector<8x8xf32>
    %23 = tpu.matmul %21, %22, %cst_7 {dimension_numbers = #tpu.dot_dimension_numbers<[1], [1], [0], [0], [0, 0, 1, 0], [], []>} : vector<8x128xbf16>, vector<8x128xbf16>, vector<8x8xf32> -> vector<8x8xf32>
    %24 = arith.mulf %16, %16 : vector<8x128xf32>
    %cst_8 = arith.constant 2.000000e-06 : f32
    %25 = vector.broadcast %cst_8 : f32 to vector<8x128xf32>
    %26 = arith.mulf %25, %16 : vector<8x128xf32>
    %27 = arith.addf %24, %26 : vector<8x128xf32>
    %cst_9 = arith.constant dense<0.000000e+00> : vector<8xf32>
    %28 = vector.multi_reduction <add>, %27, %cst_9 [1] : vector<8x128xf32> to vector<8xf32>
    %29 = vector.shape_cast %28 : vector<8xf32> to vector<8x1xf32>
    %cst_10 = arith.constant 3.200000e-11 : f32
    %30 = vector.broadcast %cst_10 : f32 to vector<8x1xf32>
    %31 = arith.addf %29, %30 : vector<8x1xf32>
    %cst_11 = arith.constant 1.000000e+00 : f32
    %32 = vector.broadcast %cst_11 : f32 to vector<1x128xf32>
    %33 = arith.mulf %20, %20 : vector<8x128xf32>
    %cst_12 = arith.constant 2.000000e-06 : f32
    %34 = vector.broadcast %cst_12 : f32 to vector<8x128xf32>
    %35 = arith.mulf %34, %20 : vector<8x128xf32>
    %36 = arith.subf %33, %35 : vector<8x128xf32>
    %cst_13 = arith.constant dense<0.000000e+00> : vector<1x8xf32>
    %37 = tpu.matmul %32, %36, %cst_13 {dimension_numbers = #tpu.dot_dimension_numbers<[1], [1], [0], [0], [0, 0, 1, 0], [], []>} : vector<1x128xf32>, vector<8x128xf32>, vector<1x8xf32> -> vector<1x8xf32>
    %38 = vector.broadcast %31 : vector<8x1xf32> to vector<8x8xf32>
    %39 = vector.broadcast %37 : vector<1x8xf32> to vector<8x8xf32>
    %40 = arith.addf %38, %39 : vector<8x8xf32>
    %cst_14 = arith.constant 2.000000e+00 : f32
    %41 = vector.broadcast %cst_14 : f32 to vector<8x8xf32>
    %42 = arith.mulf %41, %23 : vector<8x8xf32>
    %43 = arith.subf %40, %42 : vector<8x8xf32>
    %cst_15 = arith.constant 0.000000e+00 : f32
    %44 = vector.broadcast %cst_15 : f32 to vector<8x8xf32>
    %45 = arith.maximumf %43, %44 : vector<8x8xf32>
    %46 = math.sqrt %45 : vector<8x8xf32>
    %cst_16 = arith.constant 1.000000e+00 : f32
    %47 = vector.broadcast %cst_16 : f32 to vector<8x8xf32>
    %48 = arith.subf %47, %46 : vector<8x8xf32>
    %cst_17 = arith.constant 0.000000e+00 : f32
    %49 = vector.broadcast %cst_17 : f32 to vector<8x8xf32>
    %50 = arith.maximumf %48, %49 : vector<8x8xf32>
    %51 = arith.mulf %50, %50 : vector<8x8xf32>
    %c8_i32 = arith.constant 8 : i32
    %52 = arith.muli %arg0, %c8_i32 : i32
    %53 = tpu.iota {dimensions = array<i32: 0>} : vector<8x1xi32>
    %54 = vector.broadcast %52 : i32 to vector<8x1xi32>
    %55 = arith.addi %54, %53 : vector<8x1xi32>
    %c8_i32_18 = arith.constant 8 : i32
    %56 = arith.muli %arg1, %c8_i32_18 : i32
    %57 = tpu.iota {dimensions = array<i32: 1>} : vector<8x8xi32>
    %58 = vector.broadcast %56 : i32 to vector<8x8xi32>
    %59 = arith.addi %58, %57 : vector<8x8xi32>
    %c8_i32_19 = arith.constant 8 : i32
    %60 = vector.broadcast %c8_i32_19 : i32 to vector<8x1xi32>
    %61 = arith.cmpi slt, %55, %60 : vector<8x1xi32>
    %c8_i32_20 = arith.constant 8 : i32
    %62 = vector.broadcast %c8_i32_20 : i32 to vector<8x8xi32>
    %63 = arith.cmpi slt, %59, %62 : vector<8x8xi32>
    %c0_21 = arith.constant 0 : index
    %c0_22 = arith.constant 0 : index
    %64 = vector.load %arg4[%c0_21, %c0_22] : memref<8x1xi32, #tpu.memory_space<vmem>>, vector<8x1xi32>
    %c0_23 = arith.constant 0 : index
    %c0_24 = arith.constant 0 : index
    %65 = vector.load %arg5[%c0_23, %c0_24] : memref<1x8xi32, #tpu.memory_space<vmem>>, vector<1x8xi32>
    %66 = vector.broadcast %64 : vector<8x1xi32> to vector<8x8xi32>
    %67 = vector.broadcast %65 : vector<1x8xi32> to vector<8x8xi32>
    %68 = arith.cmpi ne, %66, %67 : vector<8x8xi32>
    %69 = vector.broadcast %61 : vector<8x1xi1> to vector<8x8xi1>
    %70 = arith.andi %68, %69 : vector<8x8xi1>
    %71 = arith.andi %70, %63 : vector<8x8xi1>
    %c0_25 = arith.constant 0 : index
    %c0_26 = arith.constant 0 : index
    %72 = vector.load %arg6[%c0_25, %c0_26] : memref<8x1xi32, #tpu.memory_space<vmem>>, vector<8x1xi32>
    %73 = vector.broadcast %72 : vector<8x1xi32> to vector<8x8xi32>
    %74 = arith.cmpi eq, %59, %73 : vector<8x8xi32>
    %cst_27 = arith.constant 0.000000e+00 : f32
    %75 = vector.broadcast %cst_27 : f32 to vector<8x8xf32>
    %76 = arith.select %74, %45, %75 : vector<8x8xi1>, vector<8x8xf32>
    %cst_28 = arith.constant 0.000000e+00 : f32
    %77 = vector.broadcast %cst_28 : f32 to vector<8x8xf32>
    %78 = arith.select %71, %51, %77 : vector<8x8xi1>, vector<8x8xf32>
    %79 = arith.addf %76, %78 : vector<8x8xf32>
    %c0_29 = arith.constant 0 : index
    %c0_30 = arith.constant 0 : index
    %80 = vector.load %arg9[%c0_29, %c0_30] : memref<1x1xf32, #tpu.memory_space<vmem>>, vector<1x1xf32>
    %81 = vector.shape_cast %79 : vector<8x8xf32> to vector<1x8x8xf32>
    %cst_31 = arith.constant dense<0.000000e+00> : vector<1xf32>
    %82 = vector.multi_reduction <add>, %81, %cst_31 [1, 2] : vector<1x8x8xf32> to vector<1xf32>
    %83 = vector.shape_cast %82 : vector<1xf32> to vector<1x1x1xf32>
    %84 = vector.extract %83[0, 0, 0] : f32 from vector<1x1x1xf32>
    %85 = vector.broadcast %84 : f32 to vector<1x1xf32>
    %86 = arith.addf %80, %85 : vector<1x1xf32>
    %c0_32 = arith.constant 0 : index
    %c0_33 = arith.constant 0 : index
    %87 = vector.load %arg9[%c0_32, %c0_33] : memref<1x1xf32, #tpu.memory_space<vmem>>, vector<1x1xf32>
    tpu.vector_store %arg9[%c0_32, %c0_33], %86 {strides = array<i32>} : memref<1x1xf32, #tpu.memory_space<vmem>>, vector<1x1xf32>,
    %c0_34 = arith.constant 0 : index
    %c0_35 = arith.constant 0 : index
    %88 = vector.load %arg10[%c0_34, %c0_35] : memref<1x1xi32, #tpu.memory_space<vmem>>, vector<1x1xi32>
    %89 = arith.extui %71 : vector<8x8xi1> to vector<8x8xi32>
    %90 = vector.shape_cast %89 : vector<8x8xi32> to vector<1x8x8xi32>
    %cst_36 = arith.constant dense<0> : vector<1xi32>
    %91 = vector.multi_reduction <add>, %90, %cst_36 [1, 2] : vector<1x8x8xi32> to vector<1xi32>
    %92 = vector.shape_cast %91 : vector<1xi32> to vector<1x1x1xi32>
    %93 = vector.extract %92[0, 0, 0] : i32 from vector<1x1x1xi32>
    %94 = vector.broadcast %93 : i32 to vector<1x1xi32>
    %95 = arith.addi %88, %94 : vector<1x1xi32>
    %c0_37 = arith.constant 0 : index
    %c0_38 = arith.constant 0 : index
    %96 = vector.load %arg10[%c0_37, %c0_38] : memref<1x1xi32, #tpu.memory_space<vmem>>, vector<1x1xi32>
    tpu.vector_store %arg10[%c0_37, %c0_38], %95 {strides = array<i32>} : memref<1x1xi32, #tpu.memory_space<vmem>>, vector<1x1xi32>,
    %c0_i32_39 = arith.constant 0 : i32
    %97 = arith.cmpi eq, %arg1, %c0_i32_39 : i32
    %98 = arith.extui %97 : i1 to i32
    %c0_i32_40 = arith.constant 0 : i32
    %99 = arith.cmpi ne, %98, %c0_i32_40 : i32
    scf.if %99 {
      %c0_41 = arith.constant 0 : index
      %c0_42 = arith.constant 0 : index
      %100 = vector.load %arg9[%c0_41, %c0_42] : memref<1x1xf32, #tpu.memory_space<vmem>>, vector<1x1xf32>
      %101 = vector.shape_cast %100 : vector<1x1xf32> to vector<1x1x1xf32>
      %102 = vector.broadcast %101 : vector<1x1x1xf32> to vector<1x1x128xf32>
      %c0_43 = arith.constant 0 : index
      %c0_44 = arith.constant 0 : index
      %c0_45 = arith.constant 0 : index
      %103 = vector.load %arg7[%c0_43, %c0_44, %c0_45] : memref<1x1x128xf32, #tpu.memory_space<vmem>>, vector<1x1x128xf32>
      tpu.vector_store %arg7[%c0_43, %c0_44, %c0_45], %102 {strides = array<i32>} : memref<1x1x128xf32, #tpu.memory_space<vmem>>, vector<1x1x128xf32>,
      %c0_46 = arith.constant 0 : index
      %c0_47 = arith.constant 0 : index
      %104 = vector.load %arg10[%c0_46, %c0_47] : memref<1x1xi32, #tpu.memory_space<vmem>>, vector<1x1xi32>
      %105 = vector.shape_cast %104 : vector<1x1xi32> to vector<1x1x1xi32>
      %106 = vector.broadcast %105 : vector<1x1x1xi32> to vector<1x1x128xi32>
      %c0_48 = arith.constant 0 : index
      %c0_49 = arith.constant 0 : index
      %c0_50 = arith.constant 0 : index
      %107 = vector.load %arg8[%c0_48, %c0_49, %c0_50] : memref<1x1x128xi32, #tpu.memory_space<vmem>>, vector<1x1x128xi32>
      tpu.vector_store %arg8[%c0_48, %c0_49, %c0_50], %106 {strides = array<i32>} : memref<1x1x128xi32, #tpu.memory_space<vmem>>, vector<1x1x128xi32>,
    } else {
    }
    return
  }
  func.func @transform_0(%arg0: i32, %arg1: i32) -> (i32, i32) {
    %c0_i32 = arith.constant 0 : i32
    %c0_i32_0 = arith.constant 0 : i32
    return %arg0, %c0_i32 : i32, i32
  }
  func.func @transform_1(%arg0: i32, %arg1: i32) -> (i32, i32) {
    %c0_i32 = arith.constant 0 : i32
    %c0_i32_0 = arith.constant 0 : i32
    return %arg1, %c0_i32 : i32, i32
  }
  func.func @transform_2(%arg0: i32, %arg1: i32) -> (i32, i32) {
    %c0_i32 = arith.constant 0 : i32
    %c0_i32_0 = arith.constant 0 : i32
    return %arg0, %c0_i32 : i32, i32
  }
  func.func @transform_3(%arg0: i32, %arg1: i32) -> (i32, i32) {
    %c0_i32 = arith.constant 0 : i32
    %c0_i32_0 = arith.constant 0 : i32
    return %c0_i32, %arg1 : i32, i32
  }
  func.func @transform_4(%arg0: i32, %arg1: i32) -> (i32, i32) {
    %c0_i32 = arith.constant 0 : i32
    %c0_i32_0 = arith.constant 0 : i32
    return %arg0, %c0_i32 : i32, i32
  }
  func.func @transform_5(%arg0: i32, %arg1: i32) -> (i32, i32, i32) {
    %c0_i32 = arith.constant 0 : i32
    %c0_i32_0 = arith.constant 0 : i32
    %c0_i32_1 = arith.constant 0 : i32
    return %arg0, %c0_i32, %c0_i32_0 : i32, i32, i32
  }
  func.func @transform_6(%arg0: i32, %arg1: i32) -> (i32, i32, i32) {
    %c0_i32 = arith.constant 0 : i32
    %c0_i32_0 = arith.constant 0 : i32
    %c0_i32_1 = arith.constant 0 : i32
    return %arg0, %c0_i32, %c0_i32_0 : i32, i32, i32
  }
}

</mosaic_0001>

<llo_original>
// kernel: tpu_custom_call.1
$region0: #{tpu_custom_call.1}
  #allocation0 [shape = 'u32[]', space=smem, size = 0x4, offset = 0x4, fixed_abs, tag = 'smem constant byte address 0x4 - core index']
  #allocation1 [shape = 'u32[144,128]{1,0:T(1,128)}', space=vmem, size = 0x12000, scoped, tag = 'internal scratch']
  #allocation2 [shape = 'f32[1,1]{1,0:T(1,128)}', space=vmem, size = 0x200, scoped, tag = 'scratch operand']
  #allocation3 [shape = 's32[1,1]{1,0:T(1,128)}', space=vmem, size = 0x200, scoped, tag = 'scratch operand']
  %s0 = inlined_call_operand.vmem [shape: f32[8,128], index: 0, kind: input, shape index: {}]
  %s1 = inlined_call_operand.vmem [shape: f32[8,128], index: 1, kind: input, shape index: {}]
  %s2 = inlined_call_operand.vmem [shape: s32[8,1], index: 2, kind: input, shape index: {}]
  %s3 = inlined_call_operand.vmem [shape: s32[1,8], index: 3, kind: input, shape index: {}]
  %s4 = inlined_call_operand.vmem [shape: s32[8,1], index: 4, kind: input, shape index: {}]
  %s5 = inlined_call_operand.hbm [shape: f32[1,1,128], index: 5, kind: output, shape index: {0}]
  %s6 = inlined_call_operand.hbm [shape: s32[1,1,128], index: 6, kind: output, shape index: {1}]
  %7 = xla_tuple %s5, %s6
  %s8 = sld [smem:[#allocation0]]
  $region46: #{tpu_custom_call.1} parent=0
    _
  %s10 = ssub.s32 1, %s8
  %s11 = scalar_select 0, %s10, %s8
  $region1: #{tpu_custom_call.1} parent=0
    #allocation4 [shape = 'u8[512]{0}', space=vmem, size = 0x400, scoped, tag = 'output window, operand 0, single buffered']
    #allocation5 [shape = 's32[1]{0}', space=sflag, size = 0x4, scoped, tag = 'scoped memory for tpu_custom_call.1']
    #allocation6 [shape = 'u8[512]{0}', space=vmem, size = 0x400, scoped, tag = 'output window, operand 1, single buffered']
    #allocation7 [shape = 's32[1]{0}', space=sflag, size = 0x4, scoped, tag = 'scoped memory for tpu_custom_call.1']
    %12 = vsyncpa [#allocation5], 0
    %13 = vsyncpa [#allocation7], 0
    // Predicated region
    $region2: #{tpu_custom_call.1} parent=1 // pred_check
      _
    $region3: #{tpu_custom_call.1} parent=1 // pred_check_branch
      %15 = sbr.rel (0) target = $region5
    $region4: #{tpu_custom_call.1} parent=1 // pred_region
      _
    $region5: #{tpu_custom_call.1} parent=1 // pred_fallthru
      _
    // Predicated region
    $region6: #{tpu_custom_call.1} parent=1 // pred_check
      _
    $region7: #{tpu_custom_call.1} parent=1 // pred_check_branch
      %17 = sbr.rel (0) target = $region9
    $region8: #{tpu_custom_call.1} parent=1 // pred_region
      _
    $region9: #{tpu_custom_call.1} parent=1 // pred_fallthru
      _
    // Predicated region
    $region10: #{tpu_custom_call.1} parent=1 // pred_check
      _
    $region11: #{tpu_custom_call.1} parent=1 // pred_check_branch
      %19 = sbr.rel (0) target = $region13
    $region12: #{tpu_custom_call.1} parent=1 // pred_region
      _
    $region13: #{tpu_custom_call.1} parent=1 // pred_fallthru
      _
    // Predicated region
    $region14: #{tpu_custom_call.1} parent=1 // pred_check
      _
    $region15: #{tpu_custom_call.1} parent=1 // pred_check_branch
      %21 = sbr.rel (0) target = $region17
    $region16: #{tpu_custom_call.1} parent=1 // pred_region
      _
    $region17: #{tpu_custom_call.1} parent=1 // pred_fallthru
      _
    // Predicated region
    $region18: #{tpu_custom_call.1} parent=1 // pred_check
      _
    $region19: #{tpu_custom_call.1} parent=1 // pred_check_branch
      %23 = sbr.rel (0) target = $region21
    $region20: #{tpu_custom_call.1} parent=1 // pred_region
      _
    $region21: #{tpu_custom_call.1} parent=1 // pred_fallthru
      _
    %p25 = scmp.eq.s32.totalorder 0, 0
    // Predicated region
    $region22: #{tpu_custom_call.1} parent=1 // pred_check
      %p26 = pneg %p25
    $region23: #{tpu_custom_call.1} parent=1 // pred_check_branch
      %28 = sbr.rel (%p26) target = $region25
    $region24: #{tpu_custom_call.1} parent=1 // pred_region
      %vm29 = vcmask 0
      %30 = vst.msk [vmem:[#allocation2] sm:$0x1] %vm29, 0.0
      %31 = vst.msk [vmem:[#allocation3] sm:$0x1] %vm29, 0
    $region25: #{tpu_custom_call.1} parent=1 // pred_fallthru
      _
    %v32 = vld [vmem:[%s0] sm:$0xff]
    %v33 = vld [vmem:[%s1] sm:$0xff]
    %v34 = vmul.f32 %v32, %v32
    %35 = vadd.xlane.f32.xlu0 %v34
    %v36 = vpop.xlane.xlu0 %35
    %v37 = vrsqrt.pop %v36
    %v38 = vmul.f32 %v36, %v37
    %vm39 = vcmp.eq.f32.partialorder %v36, inf
    %v40 = vsel %vm39, %v36, %v38
    %vm41 = vcmp.eq.f32.partialorder %v36, 0.0
    %v42 = vand.u32 %v36, 2147483648
    %v43 = vsel %vm41, %v42, %v40
    %v44 = vmul.f32 %v33, %v33
    %45 = vadd.xlane.f32.xlu0 %v44
    %v46 = vpop.xlane.xlu0 %45
    %v47 = vrsqrt.pop %v46
    %v48 = vmul.f32 %v46, %v47
    %vm49 = vcmp.eq.f32.partialorder %v46, inf
    %v50 = vsel %vm49, %v46, %v48
    %vm51 = vcmp.eq.f32.partialorder %v46, 0.0
    %v52 = vand.u32 %v46, 2147483648
    %v53 = vsel %vm51, %v52, %v50
    %v54 = vmax.f32 %v43, 1e-06
    %v55 = vrcp.pop %v54
    %v56 = vmul.f32 %v32, %v55
    %v57 = vmax.f32 %v53, 1e-06
    %v58 = vrcp.pop %v57
    %v59 = vmul.f32 %v33, %v58
    %v60 = vpack.c.bf16 %v56, %v56
    %v61 = vpack.c.bf16 %v59, %v59
    %62 = vmatprep.subr.bf16.mxu0 0
    %63 = vmatpush1.bf16.xpose.msra.mxu0 %v61
    %64 = vmatprep.subr.bf16.mxu0 0
    %65 = vmatpush1.bf16.xpose.msra.mxu0 0
    %66 = vmatprep.subr.bf16.mxu0 0
    %67 = vmatpush1.bf16.xpose.msra.mxu0 0
    %68 = vmatprep.subr.bf16.mxu0 0
    %69 = vmatpush1.bf16.xpose.msra.mxu0 0
    %70 = vmatprep.subr.bf16.mxu0 0
    %71 = vmatpush1.bf16.xpose.msra.mxu0 0
    %72 = vmatprep.subr.bf16.mxu0 0
    %73 = vmatpush1.bf16.xpose.msra.mxu0 0
    %74 = vmatprep.subr.bf16.mxu0 0
    %75 = vmatpush1.bf16.xpose.msra.mxu0 0
    %76 = vmatprep.subr.bf16.mxu0 0
    %77 = vmatpush1.bf16.xpose.msra.mxu0 0
    %78 = vmatprep.subr.bf16.mxu0 0
    %79 = vmatpush1.bf16.xpose.msra.mxu0 0
    %80 = vmatprep.subr.bf16.mxu0 0
    %81 = vmatpush1.bf16.xpose.msra.mxu0 0
    %82 = vmatprep.subr.bf16.mxu0 0
    %83 = vmatpush1.bf16.xpose.msra.mxu0 0
    %84 = vmatprep.subr.bf16.mxu0 0
    %85 = vmatpush1.bf16.xpose.msra.mxu0 0
    %86 = vmatprep.subr.bf16.mxu0 0
    %87 = vmatpush1.bf16.xpose.msra.mxu0 0
    %88 = vmatprep.subr.bf16.mxu0 0
    %89 = vmatpush1.bf16.xpose.msra.mxu0 0
    %90 = vmatprep.subr.bf16.mxu0 0
    %91 = vmatpush1.bf16.xpose.msra.mxu0 0
    %92 = vmatprep.subr.bf16.mxu0 0
    %93 = vmatpush1.bf16.xpose.msra.mxu0 0
    %94 = vmatprep.mubr.bf16.mxu0 0
    %95 = vmatmul.mubr.bf16.gmra.mrb[0].mxu0 %v60
    %v96 = vpop.f32.mrb[0].mxu0
    %v97 = vadd.f32 0.0, %v96
    %v98 = vpop.f32.mrb[0].mxu0
    %v99 = vpop.f32.mrb[0].mxu0
    %v100 = vpop.f32.mrb[0].mxu0
    %101 = vdwg.mxu0
    %v102 = vmul.f32 %v56, %v56
    %v103 = vmul.f32 %v56, 2e-06
    %v104 = vadd.f32 %v102, %v103
    %105 = vadd.xlane.f32.xlu0 %v104
    %v106 = vpop.xlane.xlu0 %105
    %v107 = vadd.f32 %v106, 3.2e-11
    %v108 = vmul.f32 %v59, %v59
    %v109 = vmul.f32 %v59, 2e-06
    %v110 = vsub.f32 %v108, %v109
    %111 = vmatprep.subr.mxu0 0.0
    %112 = vmatpush1.xpose.msra.mxu0 %v110
    %113 = vmatprep.subr.mxu0 0.0
    %114 = vmatpush1.xpose.msra.mxu0 0.0
    %115 = vmatprep.subr.mxu0 0.0
    %116 = vmatpush1.xpose.msra.mxu0 0.0
    %117 = vmatprep.subr.mxu0 0.0
    %118 = vmatpush1.xpose.msra.mxu0 0.0
    %119 = vmatprep.subr.mxu0 0.0
    %120 = vmatpush1.xpose.msra.mxu0 0.0
    %121 = vmatprep.subr.mxu0 0.0
    %122 = vmatpush1.xpose.msra.mxu0 0.0
    %123 = vmatprep.subr.mxu0 0.0
    %124 = vmatpush1.xpose.msra.mxu0 0.0
    %125 = vmatprep.subr.mxu0 0.0
    %126 = vmatpush1.xpose.msra.mxu0 0.0
    %127 = vmatprep.subr.mxu0 0.0
    %128 = vmatpush1.xpose.msra.mxu0 0.0
    %129 = vmatprep.subr.mxu0 0.0
    %130 = vmatpush1.xpose.msra.mxu0 0.0
    %131 = vmatprep.subr.mxu0 0.0
    %132 = vmatpush1.xpose.msra.mxu0 0.0
    %133 = vmatprep.subr.mxu0 0.0
    %134 = vmatpush1.xpose.msra.mxu0 0.0
    %135 = vmatprep.subr.mxu0 0.0
    %136 = vmatpush1.xpose.msra.mxu0 0.0
    %137 = vmatprep.subr.mxu0 0.0
    %138 = vmatpush1.xpose.msra.mxu0 0.0
    %139 = vmatprep.subr.mxu0 0.0
    %140 = vmatpush1.xpose.msra.mxu0 0.0
    %141 = vmatprep.subr.mxu0 0.0
    %142 = vmatpush1.xpose.msra.mxu0 0.0
    %143 = vmatprep.subr.mxu0 0.0
    %144 = vmatpush1.xpose.msra.mxu0 0.0
    %145 = vmatprep.subr.mxu0 0.0
    %146 = vmatpush1.xpose.msra.mxu0 0.0
    %147 = vmatprep.subr.mxu0 0.0
    %148 = vmatpush1.xpose.msra.mxu0 0.0
    %149 = vmatprep.subr.mxu0 0.0
    %150 = vmatpush1.xpose.msra.mxu0 0.0
    %151 = vmatprep.subr.mxu0 0.0
    %152 = vmatpush1.xpose.msra.mxu0 0.0
    %153 = vmatprep.subr.mxu0 0.0
    %154 = vmatpush1.xpose.msra.mxu0 0.0
    %155 = vmatprep.subr.mxu0 0.0
    %156 = vmatpush1.xpose.msra.mxu0 0.0
    %157 = vmatprep.subr.mxu0 0.0
    %158 = vmatpush1.xpose.msra.mxu0 0.0
    %159 = vmatprep.subr.mxu0 0.0
    %160 = vmatpush1.xpose.msra.mxu0 0.0
    %161 = vmatprep.subr.mxu0 0.0
    %162 = vmatpush1.xpose.msra.mxu0 0.0
    %163 = vmatprep.subr.mxu0 0.0
    %164 = vmatpush1.xpose.msra.mxu0 0.0
    %165 = vmatprep.subr.mxu0 0.0
    %166 = vmatpush1.xpose.msra.mxu0 0.0
    %167 = vmatprep.subr.mxu0 0.0
    %168 = vmatpush1.xpose.msra.mxu0 0.0
    %169 = vmatprep.subr.mxu0 0.0
    %170 = vmatpush1.xpose.msra.mxu0 0.0
    %171 = vmatprep.subr.mxu0 0.0
    %172 = vmatpush1.xpose.msra.mxu0 0.0
    %173 = vmatprep.subr.mxu0 0.0
    %174 = vmatpush1.xpose.msra.mxu0 0.0
    %175 = vmatprep.mubr.f32.mxu0 0.0
    %176 = vmatmul.mubr.f32.gmra.mrb[0].mxu0 1.0
    %v177 = vpop.f32.mrb[0].mxu0
    %v178 = vadd.f32 0.0, %v177
    %v179 = vpop.f32.mrb[0].mxu0
    %180 = vdwg.mxu0
    %v181 = vlaneseq
    %v182 = vshrl.u32 %v181, 7
    %v183 = vsub.s32 0, %v182
    %v184 = vrot.slane %v178, %v183
    %v185 = vadd.f32 %v107, %v184
    %v186 = vmul.f32 %v97, 2.0
    %v187 = vsub.f32 %v185, %v186
    %v188 = vmax.f32 %v187, 0.0
    %v189 = vrsqrt.pop %v188
    %v190 = vmul.f32 %v188, %v189
    %vm191 = vcmp.eq.f32.partialorder %v188, inf
    %v192 = vsel %vm191, %v188, %v190
    %vm193 = vcmp.eq.f32.partialorder %v188, 0.0
    %v194 = vand.u32 %v188, 2147483648
    %v195 = vsel %vm193, %v194, %v192
    %v196 = vsub.f32 1.0, %v195
    %v197 = vmax.f32 %v196, 0.0
    %v198 = vmul.f32 %v197, %v197
    %s199 = smul.u32 0, 8
    %v200 = vlaneseq
    %v201 = vshrl.u32 %v200, 7
    %v202 = vstv %s199
    %v203 = vadd.s32 %v202, %v201
    %s204 = smul.u32 0, 8
    %v205 = vlaneseq
    %v206 = vand.u32 %v205, 127
    %v207 = vstv %s204
    %v208 = vadd.s32 %v207, %v206
    %vm209 = vcmp.lt.s32.totalorder %v203, 8
    %vm210 = vcmp.lt.s32.totalorder %v208, 8
    %v211 = vld [vmem:[%s2] sm:$0xff]
    %v212 = vld [vmem:[%s3] sm:$0x1]
    %213 = vset.pattern.permute.xlu0 0
    %214 = vperm.xlu0 %213, %v211
    %v215 = vpop.permute.xlu0 %214
    %v216 = vlaneseq
    %v217 = vshrl.u32 %v216, 7
    %v218 = vsub.s32 0, %v217
    %v219 = vrot.slane %v212, %v218
    %vm220 = vcmp.ne.s32.totalorder %v215, %v219
    %v221 = vsel %vm209, 1, 0
    %vm222 = vcmp.eq.s32.totalorder %v221, 1
    %vm223 = vmand %vm220, %vm222
    %vm224 = vmand %vm223, %vm210
    %v225 = vld [vmem:[%s4] sm:$0xff]
    %226 = vset.pattern.permute.xlu0 0
    %227 = vperm.xlu0 %226, %v225
    %v228 = vpop.permute.xlu0 %227
    %vm229 = vcmp.eq.s32.totalorder %v208, %v228
    %v230 = vsel %vm229, %v188, 0.0
    %v231 = vsel %vm224, %v198, 0.0
    %v232 = vadd.f32 %v230, %v231
    %v233 = vld [vmem:[#allocation2] sm:$0x1]
    %vm234 = vcmask 64512
    %v235 = vsel %vm234, %v232, 0.0
    %236 = vadd.xlane.f32.xlu0 %v235
    %v237 = vpop.xlane.xlu0 %236
    %v238 = vrot.slane %v237, 4
    %v239 = vadd.f32 %v237, %v238
    %v240 = vrot.slane %v239, 2
    %v241 = vadd.f32 %v239, %v240
    %v242 = vrot.slane %v241, 1
    %v243 = vadd.f32 %v241, %v242
    %s244 = vtos %v243
    %v245 = vstv %s244
    %v246 = vadd.f32 %v233, %v245
    %vm247 = vcmask 0
    %248 = vst.msk [vmem:[#allocation2] sm:$0x1] %vm247, %v246
    %v249 = vld [vmem:[#allocation3] sm:$0x1]
    %v250 = vsel %vm224, 1, 0
    %v251 = vsel %vm234, %v250, 0
    %v252 = vand.u32 %v251, 65535
    %v253 = vshrl.u32 %v251, 16
    %v254 = vcvt.s32.f32 %v252
    %v255 = vcvt.s32.f32 %v253
    %256 = vadd.xlane.f32.xlu0 %v254
    %v257 = vpop.xlane.xlu0 %256
    %258 = vadd.xlane.f32.xlu0 %v255
    %v259 = vpop.xlane.xlu0 %258
    %v260 = vcvt.f32.s32 %v257
    %v261 = vcvt.f32.s32 %v259
    %v262 = vshll.u32 %v261, 16
    %v263 = vadd.s32 %v262, %v260
    %v264 = vrot.slane %v263, 4
    %v265 = vadd.s32 %v263, %v264
    %v266 = vrot.slane %v265, 2
    %v267 = vadd.s32 %v265, %v266
    %v268 = vrot.slane %v267, 1
    %v269 = vadd.s32 %v267, %v268
    %s270 = vtos %v269
    %v271 = vstv %s270
    %v272 = vadd.s32 %v249, %v271
    %273 = vst.msk [vmem:[#allocation3] sm:$0x1] %vm247, %v272
    // Predicated region
    $region26: #{tpu_custom_call.1} parent=1 // pred_check
      %p274 = pneg %p25
    $region27: #{tpu_custom_call.1} parent=1 // pred_check_branch
      %276 = sbr.rel (%p274) target = $region29
    $region28: #{tpu_custom_call.1} parent=1 // pred_region
      %v277 = vld [vmem:[#allocation2] sm:$0x1]
      %279 = vset.pattern.permute.xlu0 0
      %280 = vperm.xlu0 %279, %v277
      %v281 = vpop.permute.xlu0 %280
      %v283 = vlaneseq
      %v284 = vshrl.u32 %v283, 7
      %v285 = vsub.s32 0, %v284
      %v286 = vrot.slane %v281, %v285
      %287 = vst [vmem:[#allocation4] sm:$0x1] %v286
      %v288 = vld [vmem:[#allocation3] sm:$0x1]
      %289 = vset.pattern.permute.xlu0 0
      %290 = vperm.xlu0 %289, %v288
      %v291 = vpop.permute.xlu0 %290
      %v292 = vlaneseq
      %v293 = vshrl.u32 %v292, 7
      %v294 = vsub.s32 0, %v293
      %v295 = vrot.slane %v291, %v294
      %296 = vst [vmem:[#allocation6] sm:$0x1] %v295
    $region29: #{tpu_custom_call.1} parent=1 // pred_fallthru
      _
    // Predicated region
    $region30: #{tpu_custom_call.1} parent=1 // pred_check
      _
    $region31: #{tpu_custom_call.1} parent=1 // pred_check_branch
      %298 = sbr.rel (0) target = $region33
    $region32: #{tpu_custom_call.1} parent=1 // pred_region
      %s300 = ssub.s32 16, 16
      %301 = vsyncadd [#allocation5], %s300
      %s303 = sshll.u32 [#allocation4], 4
      %s304 = int_to_ptr.vmem [resolvable:$true] %s303
      %306 = dma.vmem_to_hbm [thread:$0]  %s304, 16, %s5, [#allocation5]
    $region33: #{tpu_custom_call.1} parent=1 // pred_fallthru
      _
    // Predicated region
    $region34: #{tpu_custom_call.1} parent=1 // pred_check
      _
    $region35: #{tpu_custom_call.1} parent=1 // pred_check_branch
      %308 = sbr.rel (0) target = $region37
    $region36: #{tpu_custom_call.1} parent=1 // pred_region
      %s310 = ssub.s32 16, 16
      %311 = vsyncadd [#allocation7], %s310
      %s313 = sshll.u32 [#allocation6], 4
      %s314 = int_to_ptr.vmem [resolvable:$true] %s313
      %316 = dma.vmem_to_hbm [thread:$0]  %s314, 16, %s6, [#allocation7]
    $region37: #{tpu_custom_call.1} parent=1 // pred_fallthru
      _
    // Predicated region
    $region38: #{tpu_custom_call.1} parent=1 // pred_check
      _
    $region39: #{tpu_custom_call.1} parent=1 // pred_check_branch
      %318 = sbr.rel (0) target = $region41
    $region40: #{tpu_custom_call.1} parent=1 // pred_region
      %319 = dma.done [#allocation5], 16
    $region41: #{tpu_custom_call.1} parent=1 // pred_fallthru
      _
    // Predicated region
    $region42: #{tpu_custom_call.1} parent=1 // pred_check
      _
    $region43: #{tpu_custom_call.1} parent=1 // pred_check_branch
      %321 = sbr.rel (0) target = $region45
    $region44: #{tpu_custom_call.1} parent=1 // pred_region
      %322 = dma.done [#allocation7], 16
    $region45: #{tpu_custom_call.1} parent=1 // pred_fallthru
      _
    %323 = vsyncpa [#allocation5], 1
    %324 = vsyncpa [#allocation7], 1

</llo_original>
